<compile_context>
chip_gen: v7x
topology: tpu7x:2x2x1
jax: 0.10.0
libtpu: 0.0.40
codegen_flags: <defaults>
</compile_context>

<pallas_src>
import functools
import math

import jax
import jax.numpy as jnp
from jax import lax
from jax.experimental import pallas as pl
from jax.experimental.pallas import tpu as pltpu


_DEFAULT_TILE_BYTES = 4 * 1024 * 1024     # per-input, per-buffer row-tile target
_STRIP_TARGET_BYTES = 64 * 1024           # per-strip f32 intermediate budget (~16 vregs)
_MAX_PIPELINE_BYTES = 40 * 1024 * 1024    # cap for 2 inputs x 2 buffers (v7x VMEM = 64 MiB)
_PALLAS_MIN_ELEMENTS = 1 << 21            # below this a fused XLA reduce is faster


def _cdiv(a, b):
    return -(-a // b)


def _round_up(x, m):
    return _cdiv(x, m) * m


def _default_num_splits():
    # v7x has 2 TensorCores per chip: a leading "parallel" grid axis lets each
    # core stream half the rows. On 1-TC chips (v5e/v6e) the same split is just
    # a serial 2-loop that doubles init/finalize, so keep it at 1 there.
    try:
        kind = jax.devices()[0].device_kind.lower()
    except Exception:
        return 1
    return 2 if "v7" in kind else 1


def _strip_sum(x_ref, y_ref, lo, size, row0, rows, needs_mask):
    """Sum |log y - log x| over `size` rows starting at `lo`, folded to (8, N)."""
    x = x_ref[pl.ds(lo, size), :]
    y = y_ref[pl.ds(lo, size), :]
    if x.dtype != jnp.float32:
        x = x.astype(jnp.float32)
        y = y.astype(jnp.float32)
    d = jnp.abs(jnp.log(y) - jnp.log(x))                 # (size, N), lives in vregs
    if needs_mask:
        # Global row index of each strip row; rows >= `rows` (ragged tail or a
        # duplicate clamped tile) contribute exactly zero.
        ridx = row0 + lo + lax.broadcasted_iota(jnp.int32, (size, 1), 0)
        d = jnp.where(ridx < rows, d, 0.0)
    n = d.shape[-1]
    # Fold `size` rows onto 8 sublanes with pure VPU adds (no per-strip XLU).
    return jnp.sum(d.reshape(size // 8, 8, n), axis=0)


def _log_l1_kernel(x_ref, y_ref, o_ref, acc_ref, *, inv_n, rows, tm, strip,
                   tiles_per_split, needs_mask):
    c = pl.program_id(0)
    t = pl.program_id(1)

    @pl.when(t == 0)
    def _init():
        acc_ref[...] = jnp.zeros_like(acc_ref)

    # Intended (unclamped) first row of this tile; duplicate trailing tiles of
    # the last split have row0 >= rows and are fully masked out in _strip_sum.
    row0 = (c * tiles_per_split + t) * tm

    n = x_ref.shape[-1]
    n_strips = tm // strip
    rem = tm - n_strips * strip

    part = jnp.zeros((8, n), jnp.float32)
    if n_strips > 0:
        def body(s, carry):
            lo = pl.multiple_of(s * strip, strip)
            return carry + _strip_sum(x_ref, y_ref, lo, strip, row0, rows,
                                      needs_mask)
        part = lax.fori_loop(0, n_strips, body, part, unroll=(n_strips <= 8))
    if rem > 0:
        part = part + _strip_sum(x_ref, y_ref, n_strips * strip, rem, row0, rows,
                                 needs_mask)

    acc_ref[...] += part

    @pl.when(t == pl.num_programs(1) - 1)
    def _finalize():
        # One cross-lane XLU reduce + 1/n scale per core split; lane-dense
        # (8, 128) store, wrapper reads element [0, 0] of each split.
        partial = jnp.sum(acc_ref[...]) * inv_n
        o_ref[...] = jnp.full((8, 128), partial, jnp.float32)


def log_stft_magnitude_loss(x_mag, y_mag, *, use_pallas=None,
                            tile_bytes=_DEFAULT_TILE_BYTES, num_splits=None):
    """Pallas equivalent of LogSTFTMagnitudeLoss.forward(x_mag, y_mag).

    Args:
        x_mag: (B, #frames, #freq_bins) magnitude spectrogram of predicted signal.
        y_mag: (B, #frames, #freq_bins) magnitude spectrogram of ground truth.
        use_pallas: force (True) / bypass (False) the Pallas path; None = auto.
        tile_bytes: per-input, per-buffer row-tile VMEM budget knob.
        num_splits: leading "parallel" grid axis; None = 2 on v7x, else 1.
    Returns:
        Scalar float32 loss.
    """
    assert x_mag.shape == y_mag.shape
    N = x_mag.shape[-1]
    n_elems = math.prod(x_mag.shape)
    rows = n_elems // N
    inv_n = 1.0 / float(n_elems)

    if use_pallas is None:
        use_pallas = n_elems >= _PALLAS_MIN_ELEMENTS
    if not use_pallas or rows < 8:
        # Small-input fallback: fixed pallas_call/DMA-ramp cost would dominate,
        # and rows < 8 cannot form an 8-sublane tile.
        return jnp.mean(jnp.abs(jnp.log(y_mag) - jnp.log(x_mag)))

    if num_splits is None:
        num_splits = _default_num_splits()

    x2 = x_mag.reshape(rows, N)
    y2 = y_mag.reshape(rows, N)

    itemsize = jnp.dtype(x_mag.dtype).itemsize
    n_pad = _round_up(N, 128)                  # true lane-padded width in VMEM

    # In-kernel strip: keep per-strip f32 intermediates within ~16 vregs.
    strip = int(max(8, min(64, (_STRIP_TARGET_BYTES // (n_pad * 4)) // 8 * 8)))

    # Row tile: sized from the lane-padded width, capped by the row count and
    # by the 2-input x 2-buffer pipeline VMEM budget. Always a multiple of 8.
    tm_target = max(strip, (tile_bytes // (n_pad * itemsize)) // strip * strip)
    tm_rows_cap = (rows // 8) * 8
    tm_vmem_cap = max(8, (_MAX_PIPELINE_BYTES // (4 * n_pad * itemsize)) // 8 * 8)
    TM = int(min(tm_target, tm_rows_cap, tm_vmem_cap))

    tiles_needed = _cdiv(rows, TM)
    if tiles_needed < num_splits:
        num_splits = 1
    tiles_per_split = _cdiv(tiles_needed, num_splits)

    # Mask only when the (splits x tiles x TM) coverage exceeds the true row
    # count (ragged last tile and/or duplicate clamped tiles).
    needs_mask = (num_splits * tiles_per_split * TM != rows)
    clamp_idx = (num_splits * tiles_per_split != tiles_needed)
    last_block = tiles_needed - 1

    if clamp_idx:
        # Keep every DMA in bounds: extra tiles of the last split re-read the
        # final block and contribute zero via the row mask.
        in_map = lambda c, t: (jnp.minimum(c * tiles_per_split + t, last_block), 0)
    else:
        in_map = lambda c, t: (c * tiles_per_split + t, 0)

    kernel = functools.partial(
        _log_l1_kernel, inv_n=inv_n, rows=rows, tm=TM, strip=strip,
        tiles_per_split=tiles_per_split, needs_mask=needs_mask)

    # Explicit scoped-VMEM limit: 2 inputs x 2 pipeline buffers + scratch + slack.
    vmem_limit = int(4 * TM * n_pad * itemsize      # double-buffered input tiles
                     + 8 * n_pad * 4                # (8, N) accumulator scratch
                     + 2 * 8 * 128 * 4              # output double buffer
                     + (2 << 20))                   # Mosaic internal slack

    out = pl.pallas_call(
        kernel,
        out_shape=jax.ShapeDtypeStruct((num_splits * 8, 128), jnp.float32),
        grid_spec=pltpu.PrefetchScalarGridSpec(
            num_scalar_prefetch=0,
            grid=(num_splits, tiles_per_split),
            in_specs=[
                pl.BlockSpec((TM, N), in_map),
                pl.BlockSpec((TM, N), in_map),
            ],
            out_specs=pl.BlockSpec((8, 128), lambda c, t: (c, 0)),
            scratch_shapes=[pltpu.VMEM((8, N), jnp.float32)],
        ),
        compiler_params=pltpu.CompilerParams(
            # Row-split axis is independent (megacore on v7x); tile axis is the
            # reduction axis.
            dimension_semantics=("parallel", "arbitrary"),
            vmem_limit_bytes=vmem_limit,
        ),
        cost_estimate=pl.CostEstimate(
            flops=4 * n_elems,
            transcendentals=2 * n_elems,
            bytes_accessed=2 * n_elems * itemsize + num_splits * 8 * 128 * 4,
        ),
    )(x2, y2)

    # Each split wrote its already-normalized partial broadcast over (8, 128).
    partials = out.reshape(num_splits, 8, 128)[:, 0, 0]
    return jnp.sum(partials)


if __name__ == "__main__":
    key = jax.random.PRNGKey(0)
    ks = jax.random.split(key, 8)

    def ref_loss(x, y):
        return jnp.mean(jnp.abs(jnp.log(y) - jnp.log(x)))

    def check(name, got, want):
        got = jax.block_until_ready(got)
        want = jax.block_until_ready(want)
        assert jnp.allclose(got, want, rtol=1e-5, atol=1e-5), (name, got, want)

    # Case 1: tiny (B, #frames, #freq_bins) = (2, 8, 16). Auto path takes the
    # XLA fallback; also force the Pallas path (single tile, no masking).
    x1 = jax.random.uniform(ks[0], (2, 8, 16), jnp.float32, minval=0.1, maxval=2.0)
    y1 = jax.random.uniform(ks[1], (2, 8, 16), jnp.float32, minval=0.1, maxval=2.0)
    check("tiny/auto", log_stft_magnitude_loss(x1, y1), ref_loss(x1, y1))
    check("tiny/pallas", log_stft_magnitude_loss(x1, y1, use_pallas=True),
          ref_loss(x1, y1))

    # Case 2: small tile_bytes forces several row tiles, exercising the
    # multi-step accumulate/finalize reduction path (rows divide the tile).
    x2 = jax.random.uniform(ks[2], (2, 120, 257), jnp.float32, minval=0.1, maxval=2.0)
    y2 = jax.random.uniform(ks[3], (2, 120, 257), jnp.float32, minval=0.1, maxval=2.0)
    check("multitile/pallas",
          log_stft_magnitude_loss(x2, y2, use_pallas=True, tile_bytes=32 * 1024),
          ref_loss(x2, y2))

    # Case 3: row count 3*41=123 not a multiple of the tile -> exercises the
    # in-kernel ragged-row mask (no input padding pass).
    x3 = jax.random.uniform(ks[4], (3, 41, 129), jnp.float32, minval=0.1, maxval=2.0)
    y3 = jax.random.uniform(ks[5], (3, 41, 129), jnp.float32, minval=0.1, maxval=2.0)
    check("ragged/pallas", log_stft_magnitude_loss(x3, y3, use_pallas=True),
          ref_loss(x3, y3))

    # Case 4: forced 2-way core split with an odd tile count -> exercises the
    # clamped duplicate-tile path (fully masked extra tile) on any chip.
    x4 = jax.random.uniform(ks[6], (2, 100, 257), jnp.float32, minval=0.1, maxval=2.0)
    y4 = jax.random.uniform(ks[7], (2, 100, 257), jnp.float32, minval=0.1, maxval=2.0)
    check("split2/pallas",
          log_stft_magnitude_loss(x4, y4, use_pallas=True, num_splits=2,
                                  tile_bytes=32 * 1024),
          ref_loss(x4, y4))

    print("KERNEL_OK")
</pallas_src>

<mosaic_0001>
module attributes {stable_mosaic.version = 11 : i64} {
  func.func @_log_l1_kernel(%arg0: i32, %arg1: i32, %arg2: memref<16x16xf32, #tpu.memory_space<vmem>>, %arg3: memref<16x16xf32, #tpu.memory_space<vmem>>, %arg4: memref<8x128xf32, #tpu.memory_space<vmem>>, %arg5: memref<8x16xf32, #tpu.memory_space<vmem>>) attributes {dimension_semantics = [#tpu.dimension_semantics<parallel>, #tpu.dimension_semantics<arbitrary>], iteration_bounds = array<i64: 1, 1>, scalar_prefetch = 0 : i64, scratch_operands = 1 : i64, tpu.core_type = #tpu.core_type<tc>, window_params = [{transform_indices = @transform_0, window_bounds = array<i64: 16, 16>}, {transform_indices = @transform_1, window_bounds = array<i64: 16, 16>}, {transform_indices = @transform_2, window_bounds = array<i64: 8, 128>}]} {
    %c0_i32 = arith.constant 0 : i32
    %0 = arith.cmpi eq, %arg1, %c0_i32 : i32
    %1 = arith.extui %0 : i1 to i32
    %c0_i32_0 = arith.constant 0 : i32
    %2 = arith.cmpi ne, %1, %c0_i32_0 : i32
    scf.if %2 {
      %cst_11 = arith.constant 0.000000e+00 : f32
      %19 = vector.broadcast %cst_11 : f32 to vector<8x16xf32>
      %c0_12 = arith.constant 0 : index
      %c0_13 = arith.constant 0 : index
      %20 = vector.load %arg5[%c0_12, %c0_13] : memref<8x16xf32, #tpu.memory_space<vmem>>, vector<8x16xf32>
      tpu.vector_store %arg5[%c0_12, %c0_13], %19 {strides = array<i32>} : memref<8x16xf32, #tpu.memory_space<vmem>>, vector<8x16xf32>,
    } else {
    }
    %cst = arith.constant 0.000000e+00 : f32
    %3 = vector.broadcast %cst : f32 to vector<8x16xf32>
    %c0 = arith.constant 0 : index
    %c0_1 = arith.constant 0 : index
    %4 = vector.load %arg2[%c0, %c0_1] : memref<16x16xf32, #tpu.memory_space<vmem>>, vector<16x16xf32>
    %c0_2 = arith.constant 0 : index
    %c0_3 = arith.constant 0 : index
    %5 = vector.load %arg3[%c0_2, %c0_3] : memref<16x16xf32, #tpu.memory_space<vmem>>, vector<16x16xf32>
    %6 = math.log %5 : vector<16x16xf32>
    %7 = math.log %4 : vector<16x16xf32>
    %8 = arith.subf %6, %7 : vector<16x16xf32>
    %9 = math.absf %8 : vector<16x16xf32>
    %10 = vector.shape_cast %9 : vector<16x16xf32> to vector<2x8x16xf32>
    %cst_4 = arith.constant dense<0.000000e+00> : vector<8x16xf32>
    %11 = vector.multi_reduction <add>, %10, %cst_4 [0] : vector<2x8x16xf32> to vector<8x16xf32>
    %12 = arith.addf %3, %11 : vector<8x16xf32>
    %c0_5 = arith.constant 0 : index
    %c0_6 = arith.constant 0 : index
    %13 = vector.load %arg5[%c0_5, %c0_6] : memref<8x16xf32, #tpu.memory_space<vmem>>, vector<8x16xf32>
    %14 = arith.addf %13, %12 : vector<8x16xf32>
    %c0_7 = arith.constant 0 : index
    %c0_8 = arith.constant 0 : index
    %15 = vector.load %arg5[%c0_7, %c0_8] : memref<8x16xf32, #tpu.memory_space<vmem>>, vector<8x16xf32>
    tpu.vector_store %arg5[%c0_7, %c0_8], %14 {strides = array<i32>} : memref<8x16xf32, #tpu.memory_space<vmem>>, vector<8x16xf32>,
    %c0_i32_9 = arith.constant 0 : i32
    %16 = arith.cmpi eq, %arg1, %c0_i32_9 : i32
    %17 = arith.extui %16 : i1 to i32
    %c0_i32_10 = arith.constant 0 : i32
    %18 = arith.cmpi ne, %17, %c0_i32_10 : i32
    scf.if %18 {
      %c0_11 = arith.constant 0 : index
      %c0_12 = arith.constant 0 : index
      %19 = vector.load %arg5[%c0_11, %c0_12] : memref<8x16xf32, #tpu.memory_space<vmem>>, vector<8x16xf32>
      %20 = vector.shape_cast %19 : vector<8x16xf32> to vector<1x8x16xf32>
      %cst_13 = arith.constant dense<0.000000e+00> : vector<1xf32>
      %21 = vector.multi_reduction <add>, %20, %cst_13 [1, 2] : vector<1x8x16xf32> to vector<1xf32>
      %22 = vector.shape_cast %21 : vector<1xf32> to vector<1x1x1xf32>
      %23 = vector.extract %22[0, 0, 0] : f32 from vector<1x1x1xf32>
      %cst_14 = arith.constant 3.906250e-03 : f32
      %24 = arith.mulf %23, %cst_14 : f32
      %25 = vector.broadcast %24 : f32 to vector<8x128xf32>
      %c0_15 = arith.constant 0 : index
      %c0_16 = arith.constant 0 : index
      %26 = vector.load %arg4[%c0_15, %c0_16] : memref<8x128xf32, #tpu.memory_space<vmem>>, vector<8x128xf32>
      tpu.vector_store %arg4[%c0_15, %c0_16], %25 {strides = array<i32>} : memref<8x128xf32, #tpu.memory_space<vmem>>, vector<8x128xf32>,
    } else {
    }
    return
  }
  func.func @transform_0(%arg0: i32, %arg1: i32) -> (i32, i32) {
    %c1_i32 = arith.constant 1 : i32
    %0 = arith.muli %arg0, %c1_i32 : i32
    %1 = arith.addi %0, %arg1 : i32
    %c0_i32 = arith.constant 0 : i32
    %c0_i32_0 = arith.constant 0 : i32
    return %1, %c0_i32 : i32, i32
  }
  func.func @transform_1(%arg0: i32, %arg1: i32) -> (i32, i32) {
    %c1_i32 = arith.constant 1 : i32
    %0 = arith.muli %arg0, %c1_i32 : i32
    %1 = arith.addi %0, %arg1 : i32
    %c0_i32 = arith.constant 0 : i32
    %c0_i32_0 = arith.constant 0 : i32
    return %1, %c0_i32 : i32, i32
  }
  func.func @transform_2(%arg0: i32, %arg1: i32) -> (i32, i32) {
    %c0_i32 = arith.constant 0 : i32
    %c0_i32_0 = arith.constant 0 : i32
    return %arg0, %c0_i32 : i32, i32
  }
}

</mosaic_0001>

<llo_original>
// kernel: tpu_custom_call.1
$region0: #{tpu_custom_call.1}
  #allocation0 [shape = 'u32[]', space=smem, size = 0x4, offset = 0x4, fixed_abs, tag = 'smem constant byte address 0x4 - core index']
  #allocation1 [shape = 'u32[144,128]{1,0:T(1,128)}', space=vmem, size = 0x12000, scoped, tag = 'internal scratch']
  #allocation2 [shape = 'f32[8,16]{1,0:T(8,128)}', space=vmem, size = 0x1000, scoped, tag = 'scratch operand']
  %s0 = inlined_call_operand.hbm [shape: f32[16,16], index: 0, kind: input, shape index: {}]
  %s1 = inlined_call_operand.hbm [shape: f32[16,16], index: 1, kind: input, shape index: {}]
  %s2 = inlined_call_operand.hbm [shape: f32[8,128], index: 2, kind: output, shape index: {}]
  %s3 = sld [smem:[#allocation0]]
  $region34: #{tpu_custom_call.1} parent=0
    _
  %s5 = ssub.s32 1, %s3
  %s6 = scalar_select 0, %s5, %s3
  $region1: #{tpu_custom_call.1} parent=0
    #allocation3 [shape = 'u8[8192]{0}', space=vmem, size = 0x2000, scoped, tag = 'input window, operand 0, single buffered']
    #allocation4 [shape = 's32[1]{0}', space=sflag, size = 0x4, scoped, tag = 'scoped memory for tpu_custom_call.1']
    #allocation5 [shape = 's32[1]{0}', space=sflag, size = 0x4, scoped, tag = 'scoped memory for tpu_custom_call.1']
    #allocation6 [shape = 'u8[8192]{0}', space=vmem, size = 0x2000, scoped, tag = 'input window, operand 1, single buffered']
    #allocation7 [shape = 's32[1]{0}', space=sflag, size = 0x4, scoped, tag = 'scoped memory for tpu_custom_call.1']
    #allocation8 [shape = 'u8[4096]{0}', space=vmem, size = 0x1000, scoped, tag = 'output window, operand 0, single buffered']
    %7 = vsyncpa [#allocation4], 0
    %8 = vsyncpa [#allocation7], 0
    %9 = vsyncpa [#allocation5], 0
    // Predicated region
    $region2: #{tpu_custom_call.1} parent=1 // pred_check
      _
    $region3: #{tpu_custom_call.1} parent=1 // pred_check_branch
      %11 = sbr.rel (0) target = $region5
    $region4: #{tpu_custom_call.1} parent=1 // pred_region
      %s12 = sadd.s32 0, 0
      %s13 = smul.u32 2, %s12
      %s15 = ssub.s32 256, 256
      %16 = vsyncadd [#allocation4], %s15
      %s17 = smul.addr %s13, 128
      %s18 = scalar_lea.hbm %s0, %s17
      %s19 = sshll.u32 [#allocation3], 4
      %s20 = int_to_ptr.vmem [resolvable:$true] %s19
      %25 = dma.hbm_to_vmem [thread:$0]  %s18, 256, %s20, [#allocation4], 128, 128, 8
    $region5: #{tpu_custom_call.1} parent=1 // pred_fallthru
      _
    // Predicated region
    $region6: #{tpu_custom_call.1} parent=1 // pred_check
      _
    $region7: #{tpu_custom_call.1} parent=1 // pred_check_branch
      %27 = sbr.rel (0) target = $region9
    $region8: #{tpu_custom_call.1} parent=1 // pred_region
      %s28 = sadd.s32 0, 0
      %s29 = smul.u32 2, %s28
      %s31 = ssub.s32 256, 256
      %32 = vsyncadd [#allocation7], %s31
      %s33 = smul.addr %s29, 128
      %s34 = scalar_lea.hbm %s1, %s33
      %s35 = sshll.u32 [#allocation6], 4
      %s36 = int_to_ptr.vmem [resolvable:$true] %s35
      %41 = dma.hbm_to_vmem [thread:$0]  %s34, 256, %s36, [#allocation7], 128, 128, 8
    $region9: #{tpu_custom_call.1} parent=1 // pred_fallthru
      _
    // Predicated region
    $region10: #{tpu_custom_call.1} parent=1 // pred_check
      _
    $region11: #{tpu_custom_call.1} parent=1 // pred_check_branch
      %43 = sbr.rel (0) target = $region13
    $region12: #{tpu_custom_call.1} parent=1 // pred_region
      %44 = dma.done [#allocation4], 256
    $region13: #{tpu_custom_call.1} parent=1 // pred_fallthru
      _
    // Predicated region
    $region14: #{tpu_custom_call.1} parent=1 // pred_check
      _
    $region15: #{tpu_custom_call.1} parent=1 // pred_check_branch
      %46 = sbr.rel (0) target = $region17
    $region16: #{tpu_custom_call.1} parent=1 // pred_region
      %47 = dma.done [#allocation7], 256
    $region17: #{tpu_custom_call.1} parent=1 // pred_fallthru
      _
    %s48 = sadd.s32 0, 0
    %s49 = smul.u32 2, %s48
    %s50 = sadd.s32 0, 0
    %s51 = smul.u32 2, %s50
    %p52 = scmp.eq.s32.totalorder 0, 0
    // Predicated region
    $region18: #{tpu_custom_call.1} parent=1 // pred_check
      %p53 = pneg %p52
    $region19: #{tpu_custom_call.1} parent=1 // pred_check_branch
      %55 = sbr.rel (%p53) target = $region21
    $region20: #{tpu_custom_call.1} parent=1 // pred_region
      %vm56 = vcmask 130048
      %57 = vst.msk [vmem:[#allocation2] sm:$0xff] %vm56, 0.0
    $region21: #{tpu_custom_call.1} parent=1 // pred_fallthru
      _
    %v58 = vld [vmem:[#allocation3] sm:$0xff]
    %v59 = vld [vmem:[#allocation3 + $0x8] sm:$0xff]
    %v60 = vld [vmem:[#allocation6] sm:$0xff]
    %v61 = vld [vmem:[#allocation6 + $0x8] sm:$0xff]
    %v62 = vlog2.pop %v60
    %v63 = vmul.f32 %v62, 0.6931472
    %v64 = vlog2.pop %v61
    %v65 = vmul.f32 %v64, 0.6931472
    %v66 = vlog2.pop %v58
    %v67 = vmul.f32 %v66, 0.6931472
    %v68 = vlog2.pop %v59
    %v69 = vmul.f32 %v68, 0.6931472
    %v70 = vsub.f32 %v63, %v67
    %v71 = vsub.f32 %v65, %v69
    %v72 = vand.u32 2147483647, %v70
    %v73 = vand.u32 2147483647, %v71
    %vm74 = vcmask 130048
    %v75 = vsel %vm74, %v72, 0.0
    %v76 = vsel %vm74, %v73, 0.0
    %v77 = vadd.f32 %v75, %v76
    %v78 = vadd.f32 %v77, 0.0
    %v79 = vld [vmem:[#allocation2] sm:$0xff]
    %v80 = vadd.f32 %v79, %v78
    %81 = vst.msk [vmem:[#allocation2] sm:$0xff] %vm74, %v80
    // Predicated region
    $region22: #{tpu_custom_call.1} parent=1 // pred_check
      %p82 = pneg %p52
    $region23: #{tpu_custom_call.1} parent=1 // pred_check_branch
      %84 = sbr.rel (%p82) target = $region25
    $region24: #{tpu_custom_call.1} parent=1 // pred_region
      %v85 = vld [vmem:[#allocation2] sm:$0xff]
      %v86 = vsel %vm74, %v85, 0.0
      %87 = vadd.xlane.f32.xlu0 %v86
      %v88 = vpop.xlane.xlu0 %87
      %v89 = vrot.slane %v88, 4
      %v90 = vadd.f32 %v88, %v89
      %v91 = vrot.slane %v90, 2
      %v92 = vadd.f32 %v90, %v91
      %v93 = vrot.slane %v92, 1
      %v94 = vadd.f32 %v92, %v93
      %s95 = vtos %v94
      %s96 = smul.f32 %s95, 0.00390625
      %v97 = vstv %s96
      %98 = vst [vmem:[#allocation8] sm:$0xff] %v97
    $region25: #{tpu_custom_call.1} parent=1 // pred_fallthru
      _
    // Predicated region
    $region26: #{tpu_custom_call.1} parent=1 // pred_check
      _
    $region27: #{tpu_custom_call.1} parent=1 // pred_check_branch
      %100 = sbr.rel (0) target = $region29
    $region28: #{tpu_custom_call.1} parent=1 // pred_region
      %s102 = ssub.s32 128, 128
      %103 = vsyncadd [#allocation5], %s102
      %s105 = sshll.u32 [#allocation8], 4
      %s106 = int_to_ptr.vmem [resolvable:$true] %s105
      %108 = dma.vmem_to_hbm [thread:$0]  %s106, 128, %s2, [#allocation5]
    $region29: #{tpu_custom_call.1} parent=1 // pred_fallthru
      _
    // Predicated region
    $region30: #{tpu_custom_call.1} parent=1 // pred_check
      _
    $region31: #{tpu_custom_call.1} parent=1 // pred_check_branch
      %110 = sbr.rel (0) target = $region33
    $region32: #{tpu_custom_call.1} parent=1 // pred_region
      %111 = dma.done [#allocation5], 128
    $region33: #{tpu_custom_call.1} parent=1 // pred_fallthru
      _
    %112 = vsyncpa [#allocation4], 1
    %113 = vsyncpa [#allocation7], 1
    %114 = vsyncpa [#allocation5], 1

</llo_original>
